<compile_context>
chip_gen: v5e
topology: v5e:2x2
jax: 0.10.0
libtpu: 0.0.40
codegen_flags: <defaults>
</compile_context>

<pallas_src>
import functools

import jax
import jax.numpy as jnp
from jax import lax
from jax.experimental import pallas as pl
from jax.experimental.pallas import tpu as pltpu
from jax.scipy.linalg import block_diag


# ---------------------------------------------------------------------------
# helpers
# ---------------------------------------------------------------------------
def _round_up(x, m):
    return (x + m - 1) // m * m


def _pick_row_tile(rows, target):
    """Largest multiple of 8 that divides `rows` and is <= target (None if rows % 8)."""
    t = min(target, rows)
    t -= t % 8
    while t >= 8:
        if rows % t == 0:
            return t
        t -= 8
    return None


def _pick_col_tile(cols, target):
    """Lane tile: full array when small, else a multiple of 128 that divides cols."""
    if cols <= target:
        return cols
    t = (target // 128) * 128
    while t >= 128:
        if cols % t == 0:
            return t
        t -= 128
    return cols


# ---------------------------------------------------------------------------
# Pallas kernels
# ---------------------------------------------------------------------------
def _mm_bias_kernel(x_ref, w_ref, b_ref, o_ref, *, relu):
    """out = x @ w + b (optionally ReLU) for one row tile."""
    y = jnp.dot(x_ref[...], w_ref[...], preferred_element_type=jnp.float32)
    y = y + b_ref[...]
    if relu:
        y = jnp.maximum(y, 0.0)
    o_ref[...] = y.astype(o_ref.dtype)


@functools.partial(jax.jit, static_argnames=("relu", "tile_m", "pad_out_lanes"))
def matmul_bias(x, w, b, *, relu, tile_m=512, pad_out_lanes=True):
    """x:[M,K], w:[K,N], b:[1,N] -> [M,N] f32, row-tiled ("parallel") matmul.

    Used for the conditioning1 convs (stride==kernel, pad 0 -> patch matmul).
    """
    M, K = x.shape
    N = w.shape[1]

    # Lane-dense output: pad narrow out dims to 128 -> unmasked vector stores.
    n_out = N
    if pad_out_lanes and N < 128:
        n_out = 128
        w = jnp.pad(w, ((0, 0), (0, n_out - N)))
        b = jnp.pad(b, ((0, 0), (0, n_out - N)))

    tm = min(tile_m, _round_up(M, 8))
    m_pad = _round_up(M, tm)
    if m_pad != M:
        x = jnp.pad(x, ((0, m_pad - M), (0, 0)))

    out = pl.pallas_call(
        functools.partial(_mm_bias_kernel, relu=relu),
        out_shape=jax.ShapeDtypeStruct((m_pad, n_out), jnp.float32),
        grid=(m_pad // tm,),
        in_specs=[
            pl.BlockSpec((tm, K), lambda i: (i, 0)),
            pl.BlockSpec((K, n_out), lambda i: (0, 0)),
            pl.BlockSpec((1, n_out), lambda i: (0, 0)),
        ],
        out_specs=pl.BlockSpec((tm, n_out), lambda i: (i, 0)),
        compiler_params=pltpu.CompilerParams(dimension_semantics=("parallel",)),
    )(x, w, b)

    if m_pad != M:
        out = out[:M]
    if n_out != N:
        out = out[:, :N]
    return out


def _lllite_fused_kernel(x_ref, cx_ref, wd_ref, bd_ref, wmc_ref, wmd_ref,
                         bm_ref, wuo_ref, worg_ref, bout_ref, o_ref):
    """Folded LLLite linear-branch forward for one (row-tile, out-col-tile).

      down = relu(x @ Wd + bd)
      mid  = relu(cx @ Wmc + down @ Wmd + bm)   (== relu(cat([cx,down]) @ Wm + bm))
      out  = x @ Worg + mid @ Wuo + bout
    with Wuo = (multiplier*Wu)@Worg and bout = borg + multiplier*(bu@Worg)
    precomputed on the host, so the big x@Worg matmul is independent of the
    tiny MLP chain and the extra up-projection matmul / x+u add disappear.
    Splitting Wm into Wmc/Wmd avoids an in-kernel lane concat (XLU copy) and
    keeps both small dots on the MXU.
    """
    cdt = x_ref.dtype                       # matmul compute dtype (f32 or bf16)
    x = x_ref[...]
    cx = cx_ref[...]
    # Big matmul first — does not wait on the serial down/mid chain (the LLO
    # scheduler overlaps the tiny dots with its MXU drain).
    y = jnp.dot(x, worg_ref[...], preferred_element_type=jnp.float32)
    d = jnp.dot(x, wd_ref[...], preferred_element_type=jnp.float32) + bd_ref[...]
    d = jnp.maximum(d, 0.0).astype(cdt)     # bias/ReLU in f32 (v5e VPU has no bf16)
    m = (jnp.dot(cx, wmc_ref[...], preferred_element_type=jnp.float32)
         + jnp.dot(d, wmd_ref[...], preferred_element_type=jnp.float32)
         + bm_ref[...])
    m = jnp.maximum(m, 0.0).astype(cdt)
    y = y + jnp.dot(m, wuo_ref[...], preferred_element_type=jnp.float32) + bout_ref[...]
    o_ref[...] = y.astype(o_ref.dtype)


@functools.partial(
    jax.jit,
    static_argnames=("rep", "compute_dtype", "tile_m_target", "tile_n_target",
                     "pad_out_lanes"))
def lllite_forward(x_flat, cx_flat, params, *, rep, compute_dtype=jnp.float32,
                   tile_m_target=512, tile_n_target=512, pad_out_lanes=True):
    """x_flat:[M,in], cx_flat:[Mc,cond] (un-repeated; M == rep*Mc) -> [M,out]."""
    wd, bd, wmc, wmd, bm, wuo, worg, bout = params
    M, in_dim = x_flat.shape
    Mc = cx_flat.shape[0]
    assert M == rep * Mc, (M, rep, Mc)
    mlp = wd.shape[1]
    out_dim = worg.shape[1]

    # Lane-dense output: pad narrow out dims to 128 -> unmasked vector stores.
    n_out = out_dim
    if pad_out_lanes and out_dim < 128:
        n_out = 128
        padn = n_out - out_dim
        wuo = jnp.pad(wuo, ((0, 0), (0, padn)))
        worg = jnp.pad(worg, ((0, 0), (0, padn)))
        bout = jnp.pad(bout, ((0, 0), (0, padn)))

    # Row tiling.  Main path: tile divides the *un-repeated* cond rows so the
    # cx index_map can wrap instead of materializing the batch repeat.
    tm = _pick_row_tile(Mc, tile_m_target)
    m_pad = M
    if tm is not None:
        wrap_rows = Mc
    else:
        # Fallback for token counts not divisible by 8: materialize the repeat
        # and zero-pad rows (padded rows produce discarded garbage).
        if rep > 1:
            cx_flat = jnp.tile(cx_flat, (rep, 1))
        m_pad = _round_up(M, 8)
        if m_pad != M:
            pad = m_pad - M
            x_flat = jnp.pad(x_flat, ((0, pad), (0, 0)))
            cx_flat = jnp.pad(cx_flat, ((0, pad), (0, 0)))
        wrap_rows = m_pad
        tm = _pick_row_tile(m_pad, tile_m_target)

    # v7x has 2 TensorCores: keep >= 2 parallel row-steps when possible.
    if m_pad // tm < 2:
        half = tm // 2
        if half >= 8 and half % 8 == 0 and wrap_rows % half == 0:
            tm = half
    n_cx_blocks = wrap_rows // tm
    cond_cols = cx_flat.shape[1]

    # Out-column tiling (keeps a production-sized Worg out of VMEM trouble on
    # v7x's 64 MiB and gives a second parallel axis; for small out it is 1).
    tn = _pick_col_tile(n_out, tile_n_target)

    # Cast matmul inputs; biases stay f32 (epilogue in f32 on all chips).
    cdt = compute_dtype
    x_c = x_flat.astype(cdt)
    cx_c = cx_flat.astype(cdt)
    wd_c, wmc_c, wmd_c, wuo_c, worg_c = (a.astype(cdt)
                                         for a in (wd, wmc, wmd, wuo, worg))

    grid = (m_pad // tm, n_out // tn)
    out = pl.pallas_call(
        _lllite_fused_kernel,
        out_shape=jax.ShapeDtypeStruct((m_pad, n_out), jnp.float32),
        grid=grid,
        in_specs=[
            pl.BlockSpec((tm, in_dim), lambda i, j: (i, 0)),
            # wrap: both cond/uncond batch halves read the same cx block
            pl.BlockSpec((tm, cond_cols), lambda i, j: (i % n_cx_blocks, 0)),
            pl.BlockSpec((in_dim, mlp), lambda i, j: (0, 0)),
            pl.BlockSpec((1, mlp), lambda i, j: (0, 0)),
            pl.BlockSpec((cond_cols, mlp), lambda i, j: (0, 0)),
            pl.BlockSpec((mlp, mlp), lambda i, j: (0, 0)),
            pl.BlockSpec((1, mlp), lambda i, j: (0, 0)),
            pl.BlockSpec((mlp, tn), lambda i, j: (0, j)),
            pl.BlockSpec((in_dim, tn), lambda i, j: (0, j)),
            pl.BlockSpec((1, tn), lambda i, j: (0, j)),
        ],
        out_specs=pl.BlockSpec((tm, tn), lambda i, j: (i, j)),
        compiler_params=pltpu.CompilerParams(
            dimension_semantics=("parallel", "parallel")),
    )(x_c, cx_c, wd_c, bd, wmc_c, wmd_c, bm, wuo_c, worg_c, bout)

    if m_pad != M:
        out = out[:M]
    if n_out != out_dim:
        out = out[:, :out_dim]
    return out


# ---------------------------------------------------------------------------
# Glue: patchify a stride==kernel, pad=0 Conv2d into a matmul
# ---------------------------------------------------------------------------
def patchify(x_nchw, k):
    n, c, h, w = x_nchw.shape
    nh, nw = h // k, w // k
    p = x_nchw.reshape(n, c, nh, k, nw, k).transpose(0, 2, 4, 1, 3, 5)
    return p.reshape(n * nh * nw, c * k * k), (n, nh, nw)


def conv_weight_to_mat(w_oihw):
    o = w_oihw.shape[0]
    return w_oihw.reshape(o, -1).T  # [C*kh*kw, O], matches patch (C,kh,kw) order


# ---------------------------------------------------------------------------
# Module ports
# ---------------------------------------------------------------------------
class LLLiteModuleJAX:
    """JAX/Pallas port of LLLiteModule (Linear branch, depth=1)."""

    def __init__(self, key, *, in_dim, cond_emb_dim=16, mlp_dim=16, multiplier=1.0):
        self.in_dim = in_dim
        self.cond_emb_dim = cond_emb_dim
        self.mlp_dim = mlp_dim
        self.multiplier = multiplier
        self.cond_emb = None
        self._folded = None
        self._folded_mult = None

        ks = jax.random.split(key, 12)
        ce2 = cond_emb_dim // 2
        s = 0.1
        # conditioning1 (depth=1): Conv2d(3, ce2, k=4, s=4) -> ReLU -> Conv2d(ce2, ce, k=2, s=2)
        self.c1_w = s * jax.random.normal(ks[0], (ce2, 3, 4, 4), jnp.float32)
        self.c1_b = s * jax.random.normal(ks[1], (ce2,), jnp.float32)
        self.c2_w = s * jax.random.normal(ks[2], (cond_emb_dim, ce2, 2, 2), jnp.float32)
        self.c2_b = s * jax.random.normal(ks[3], (cond_emb_dim,), jnp.float32)
        # down: Linear(in, mlp), mid: Linear(mlp+cond, mlp), up: Linear(mlp, in)
        # (stored pre-transposed [in, out]).  NOTE: the original zero-inits `up`;
        # random values here so the kernel path is numerically exercised.
        self.wd = s * jax.random.normal(ks[4], (in_dim, mlp_dim), jnp.float32)
        self.bd = s * jax.random.normal(ks[5], (1, mlp_dim), jnp.float32)
        wm = s * jax.random.normal(ks[6], (cond_emb_dim + mlp_dim, mlp_dim), jnp.float32)
        self.wmc = wm[:cond_emb_dim]     # rows of Wm that multiply cx
        self.wmd = wm[cond_emb_dim:]     # rows of Wm that multiply down(x)
        self.bm = s * jax.random.normal(ks[7], (1, mlp_dim), jnp.float32)
        self.wu = s * jax.random.normal(ks[8], (mlp_dim, in_dim), jnp.float32)
        self.bu = s * jax.random.normal(ks[9], (1, in_dim), jnp.float32)
        # org module: Linear(in_dim, in_dim) (attn to_q/to_k/to_v)
        self.worg = s * jax.random.normal(ks[10], (in_dim, in_dim), jnp.float32)
        self.borg = s * jax.random.normal(ks[11], (1, in_dim), jnp.float32)

    # --- conditioning1 via tiled Pallas matmuls on patchified inputs ---------
    def set_cond_image(self, cond_image):
        if cond_image is None:
            self.cond_emb = None
            return
        p1, (n, nh, nw) = patchify(cond_image, 4)
        h1 = matmul_bias(p1, conv_weight_to_mat(self.c1_w),
                         self.c1_b[None, :], relu=True)            # [n*nh*nw, ce2]
        h1_nchw = h1.reshape(n, nh, nw, -1).transpose(0, 3, 1, 2)
        p2, (n2, nh2, nw2) = patchify(h1_nchw, 2)
        h2 = matmul_bias(p2, conv_weight_to_mat(self.c2_w),
                         self.c2_b[None, :], relu=False)           # [n*h*w, ce]
        # == cx.view(n, c, h*w).permute(0, 2, 1) of the NCHW conv output
        self.cond_emb = h2.reshape(n2, nh2 * nw2, self.cond_emb_dim)

    # --- host-side fold of up -> org (removes a matmul and the multiplier) ---
    def _folded_params(self):
        if self._folded is None or self._folded_mult != self.multiplier:
            wuo = (self.multiplier * self.wu) @ self.worg
            bout = self.borg + self.multiplier * (self.bu @ self.worg)
            self._folded = (self.wd, self.bd, self.wmc, self.wmd, self.bm,
                            wuo, self.worg, bout)
            self._folded_mult = self.multiplier
        return self._folded

    # --- forward --------------------------------------------------------------
    def forward(self, x, compute_dtype=jnp.float32):
        b, s, _ = x.shape
        if self.cond_emb is None or self.multiplier == 0.0:
            # mirrors torch: call the original (wrapped) Linear directly
            out = matmul_bias(x.reshape(b * s, self.in_dim), self.worg, self.borg,
                              relu=False)
            return out.reshape(b, s, -1)
        cx = self.cond_emb
        nc, sc, _ = cx.shape
        assert sc == s, "token count of x must match cond_emb"
        if b == 2 * nc:
            rep = 2          # cond/uncond batch: torch `cx.repeat(2, 1, 1)`
        elif b == nc:
            rep = 1
        else:
            raise ValueError(f"batch mismatch: x batch {b} vs cond batch {nc}")
        # TODO(synk): dropout (training) and batch_cond_only/use_zeros_for_batch_uncond
        # are not implemented (defaults in the original are off).
        out = lllite_forward(
            x.reshape(b * s, self.in_dim),
            cx.reshape(nc * s, self.cond_emb_dim),
            self._folded_params(),
            rep=rep,
            compute_dtype=compute_dtype,
        )
        return out.reshape(b, s, -1)


def fuse_qkv_forward(mods, x, compute_dtype=jnp.float32):
    """Run several LLLite modules that share x (attn1 to_q/to_k/to_v) as ONE
    pallas_call: weights concatenated / block-diagonalized along the out axis,
    giving a lane-dense output and a single large x@Worg_cat matmul."""
    in_dim = mods[0].in_dim
    assert all(m.in_dim == in_dim for m in mods)
    assert all(m.cond_emb is not None for m in mods)
    b, s, _ = x.shape
    cxs = [m.cond_emb for m in mods]
    nc = cxs[0].shape[0]
    assert all(c.shape == cxs[0].shape for c in cxs)
    cx = jnp.concatenate(cxs, axis=-1)                       # [nc, s, G*cond]
    if b == 2 * nc:
        rep = 2
    elif b == nc:
        rep = 1
    else:
        raise ValueError("batch mismatch")
    params = (
        jnp.concatenate([m.wd for m in mods], axis=1),                        # [in, G*mlp]
        jnp.concatenate([m.bd for m in mods], axis=1),
        block_diag(*[m.wmc for m in mods]),                                   # [G*cond, G*mlp]
        block_diag(*[m.wmd for m in mods]),                                   # [G*mlp, G*mlp]
        jnp.concatenate([m.bm for m in mods], axis=1),
        block_diag(*[(m.multiplier * m.wu) @ m.worg for m in mods]),          # [G*mlp, G*out]
        jnp.concatenate([m.worg for m in mods], axis=1),                      # [in, G*out]
        jnp.concatenate([m.borg + m.multiplier * (m.bu @ m.worg) for m in mods], axis=1),
    )
    out = lllite_forward(x.reshape(b * s, in_dim),
                         cx.reshape(nc * s, cx.shape[-1]),
                         params, rep=rep, compute_dtype=compute_dtype)
    return out.reshape(b, s, -1)


class ControlNetLLLiteJAX:
    """Container mirroring ControlNetLLLite (forward(x) is identity)."""

    def __init__(self, modules):
        self.unet_modules = modules

    def forward(self, x):
        return x

    def set_cond_image(self, cond_image):
        for m in self.unet_modules:
            m.set_cond_image(cond_image)

    def set_multiplier(self, multiplier):
        for m in self.unet_modules:
            m.multiplier = multiplier


# ---------------------------------------------------------------------------
# Pure-JAX reference (faithful torch ordering, for verification)
# ---------------------------------------------------------------------------
def reference(mod, cond_image, x):
    dn = ("NCHW", "OIHW", "NCHW")
    h = lax.conv_general_dilated(cond_image, mod.c1_w, (4, 4), "VALID",
                                 dimension_numbers=dn) + mod.c1_b[None, :, None, None]
    h = jnp.maximum(h, 0.0)
    h = lax.conv_general_dilated(h, mod.c2_w, (2, 2), "VALID",
                                 dimension_numbers=dn) + mod.c2_b[None, :, None, None]
    n, c, hh, ww = h.shape
    cx = h.reshape(n, c, hh * ww).transpose(0, 2, 1)          # [n, h*w, ce]
    if x.shape[0] // 2 == cx.shape[0]:
        cx = jnp.tile(cx, (2, 1, 1))
    d = jnp.maximum(jnp.einsum("bsc,cm->bsm", x, mod.wd) + mod.bd[0], 0.0)
    cat = jnp.concatenate([cx, d], axis=2)
    wm = jnp.concatenate([mod.wmc, mod.wmd], axis=0)
    m = jnp.maximum(jnp.einsum("bsc,cm->bsm", cat, wm) + mod.bm[0], 0.0)
    u = (jnp.einsum("bsm,mc->bsc", m, mod.wu) + mod.bu[0]) * mod.multiplier
    return jnp.einsum("bsc,co->bso", x + u, mod.worg) + mod.borg[0]


# ---------------------------------------------------------------------------
if __name__ == "__main__":
    key = jax.random.PRNGKey(0)
    k_q, k_k, k_v, k_img, k_x = jax.random.split(key, 5)

    in_dim = 32          # hidden size of the wrapped attn to_q/to_k/to_v Linear
    cond_emb_dim = 16
    mlp_dim = 16
    B, S = 2, 64         # cond/uncond batch; S = h*w tokens at this depth
    H = W = 64           # cond image; depth=1 -> 64/4/2 = 8 -> 8*8 = 64 tokens

    # attn1 to_q / to_k / to_v LLLite modules (each has its own conditioning1)
    mods = [LLLiteModuleJAX(k, in_dim=in_dim, cond_emb_dim=cond_emb_dim,
                            mlp_dim=mlp_dim, multiplier=1.0)
            for k in (k_q, k_k, k_v)]
    net = ControlNetLLLiteJAX(mods)

    cond_image = jax.random.normal(k_img, (1, 3, H, W), jnp.float32)
    x = jax.random.normal(k_x, (B, S, in_dim), jnp.float32)

    net.set_cond_image(cond_image)
    refs = [reference(m, cond_image, x) for m in mods]

    # NOTE on tolerances: f32 matmuls on the TPU MXU (both in the Pallas kernel
    # and in the XLA reference) may use bf16 passes at default precision; since
    # the kernel uses the algebraically-folded ordering, rounding no longer
    # cancels exactly against the torch-ordered reference, so we check a loose
    # max error plus a tighter mean error (which still catches structural bugs).
    outs_f32 = []
    for m, r in zip(mods, refs):
        out = jax.block_until_ready(m.forward(x))
        outs_f32.append(out)
        assert out.shape == r.shape
        err = jnp.abs(out - r)
        assert float(jnp.max(err)) < 5e-2, float(jnp.max(err))
        assert float(jnp.mean(err)) < 5e-3, float(jnp.mean(err))

    # bf16 matmul-input path (v6e/v7x): loose check against the f32 reference.
    out_bf16 = jax.block_until_ready(mods[0].forward(x, compute_dtype=jnp.bfloat16))
    err_bf16 = jnp.abs(out_bf16 - refs[0])
    assert bool(jnp.all(jnp.isfinite(out_bf16)))
    assert float(jnp.max(err_bf16)) < 1e-1, float(jnp.max(err_bf16))
    assert float(jnp.mean(err_bf16)) < 2e-2, float(jnp.mean(err_bf16))

    # Fused q/k/v (single lane-dense pallas_call) must match the per-module
    # kernel outputs (tight) and the references (loose).
    out_qkv = jax.block_until_ready(fuse_qkv_forward(mods, x))
    cat_kernel = jnp.concatenate(outs_f32, axis=-1)
    cat_ref = jnp.concatenate(refs, axis=-1)
    assert out_qkv.shape == cat_ref.shape
    assert float(jnp.max(jnp.abs(out_qkv - cat_kernel))) < 1e-4
    assert float(jnp.max(jnp.abs(out_qkv - cat_ref))) < 5e-2

    # multiplier == 0.0 falls back to the wrapped org Linear (exactly x @ Worg + b)
    net.set_multiplier(0.0)
    out_m0 = jax.block_until_ready(mods[0].forward(x))
    ref_m0 = jnp.einsum("bsc,co->bso", x, mods[0].worg) + mods[0].borg[0]
    assert float(jnp.max(jnp.abs(out_m0 - ref_m0))) < 5e-2
    net.set_multiplier(1.0)

    # ControlNetLLLite.forward is identity
    assert jnp.array_equal(net.forward(x), x)

    print("KERNEL_OK")
</pallas_src>

<mosaic_0001>
module attributes {stable_mosaic.version = 11 : i64} {
  func.func @_mm_bias_kernel(%arg0: i32, %arg1: memref<256x48xf32, #tpu.memory_space<vmem>>, %arg2: memref<48x128xf32, #tpu.memory_space<vmem>>, %arg3: memref<1x128xf32, #tpu.memory_space<vmem>>, %arg4: memref<256x128xf32, #tpu.memory_space<vmem>>) attributes {dimension_semantics = [#tpu.dimension_semantics<parallel>], iteration_bounds = array<i64: 1>, scalar_prefetch = 0 : i64, scratch_operands = 0 : i64, tpu.core_type = #tpu.core_type<tc>, window_params = [{transform_indices = @transform_0, window_bounds = array<i64: 256, 48>}, {pipeline_mode = #tpu.pipeline_mode<synchronous>, transform_indices = @transform_1, window_bounds = array<i64: 48, 128>}, {pipeline_mode = #tpu.pipeline_mode<synchronous>, transform_indices = @transform_2, window_bounds = array<i64: 1, 128>}, {transform_indices = @transform_3, window_bounds = array<i64: 256, 128>}]} {
    %c0 = arith.constant 0 : index
    %c0_0 = arith.constant 0 : index
    %0 = vector.load %arg1[%c0, %c0_0] : memref<256x48xf32, #tpu.memory_space<vmem>>, vector<256x48xf32>
    %c0_1 = arith.constant 0 : index
    %c0_2 = arith.constant 0 : index
    %1 = vector.load %arg2[%c0_1, %c0_2] : memref<48x128xf32, #tpu.memory_space<vmem>>, vector<48x128xf32>
    %cst = arith.constant dense<0.000000e+00> : vector<256x128xf32>
    %2 = tpu.matmul %0, %1, %cst {dimension_numbers = #tpu.dot_dimension_numbers<[1], [0], [0], [1], [0, 0, 1, 1], [], []>} : vector<256x48xf32>, vector<48x128xf32>, vector<256x128xf32> -> vector<256x128xf32>
    %c0_3 = arith.constant 0 : index
    %c0_4 = arith.constant 0 : index
    %3 = vector.load %arg3[%c0_3, %c0_4] : memref<1x128xf32, #tpu.memory_space<vmem>>, vector<1x128xf32>
    %4 = vector.broadcast %3 : vector<1x128xf32> to vector<256x128xf32>
    %5 = arith.addf %2, %4 : vector<256x128xf32>
    %cst_5 = arith.constant 0.000000e+00 : f32
    %6 = vector.broadcast %cst_5 : f32 to vector<256x128xf32>
    %7 = arith.maximumf %5, %6 : vector<256x128xf32>
    %c0_6 = arith.constant 0 : index
    %c0_7 = arith.constant 0 : index
    %8 = vector.load %arg4[%c0_6, %c0_7] : memref<256x128xf32, #tpu.memory_space<vmem>>, vector<256x128xf32>
    tpu.vector_store %arg4[%c0_6, %c0_7], %7 {strides = array<i32>} : memref<256x128xf32, #tpu.memory_space<vmem>>, vector<256x128xf32>,
    return
  }
  func.func @transform_0(%arg0: i32) -> (i32, i32) {
    %c0_i32 = arith.constant 0 : i32
    %c0_i32_0 = arith.constant 0 : i32
    return %arg0, %c0_i32 : i32, i32
  }
  func.func @transform_1(%arg0: i32) -> (i32, i32) {
    %c0_i32 = arith.constant 0 : i32
    %c0_i32_0 = arith.constant 0 : i32
    %c0_i32_1 = arith.constant 0 : i32
    return %c0_i32, %c0_i32_0 : i32, i32
  }
  func.func @transform_2(%arg0: i32) -> (i32, i32) {
    %c0_i32 = arith.constant 0 : i32
    %c0_i32_0 = arith.constant 0 : i32
    %c0_i32_1 = arith.constant 0 : i32
    return %c0_i32, %c0_i32_0 : i32, i32
  }
  func.func @transform_3(%arg0: i32) -> (i32, i32) {
    %c0_i32 = arith.constant 0 : i32
    %c0_i32_0 = arith.constant 0 : i32
    return %arg0, %c0_i32 : i32, i32
  }
}

</mosaic_0001>

<llo_original>
// kernel: matmul_bias.1
$region0: #{matmul_bias.1}
  #allocation0 [shape = 'u32[]', space=smem, size = 0x4, offset = 0x4, fixed_abs, tag = 'smem constant byte address 0x4 - core index']
  #allocation1 [shape = 'u32[72,128]{1,0:T(1,128)}', space=vmem, size = 0x9000, scoped, tag = 'internal scratch']
  %s0 = inlined_call_operand.vmem [shape: f32[256,48], index: 0, kind: input, shape index: {}]
  %s1 = inlined_call_operand.vmem [shape: f32[48,128], index: 1, kind: input, shape index: {}]
  %s2 = inlined_call_operand.vmem [shape: f32[1,128], index: 2, kind: input, shape index: {}]
  %s3 = inlined_call_operand.vmem [shape: f32[256,128], index: 3, kind: output, shape index: {}]
  %s4 = sld [smem:[#allocation0]]
  $region22: #{matmul_bias.1} parent=0
    _
  %s6 = ssub.s32 1, %s4
  %s7 = scalar_select 0, %s6, %s4
  // Predicated region
  $region2: #{matmul_bias.1} parent=0 // pred_check
    _
  $region3: #{matmul_bias.1} parent=0 // pred_check_branch
    %9 = sbr.rel (0) target = $region5
  $region4: #{matmul_bias.1} parent=0 // pred_region
    _
  $region5: #{matmul_bias.1} parent=0 // pred_fallthru
    _
  // Predicated region
  $region6: #{matmul_bias.1} parent=0 // pred_check
    _
  $region7: #{matmul_bias.1} parent=0 // pred_check_branch
    %11 = sbr.rel (0) target = $region9
  $region8: #{matmul_bias.1} parent=0 // pred_region
    _
  $region9: #{matmul_bias.1} parent=0 // pred_fallthru
    _
  // Predicated region
  $region10: #{matmul_bias.1} parent=0 // pred_check
    _
  $region11: #{matmul_bias.1} parent=0 // pred_check_branch
    %13 = sbr.rel (0) target = $region13
  $region12: #{matmul_bias.1} parent=0 // pred_region
    _
  $region13: #{matmul_bias.1} parent=0 // pred_fallthru
    _
  %v14 = vld [vmem:[%s0] sm:$0xff]
  %v15 = vld [vmem:[%s0 + $0x8] sm:$0xff]
  %v16 = vld [vmem:[%s0 + $0x10] sm:$0xff]
  %v17 = vld [vmem:[%s0 + $0x18] sm:$0xff]
  %v18 = vld [vmem:[%s0 + $0x20] sm:$0xff]
  %v19 = vld [vmem:[%s0 + $0x28] sm:$0xff]
  %v20 = vld [vmem:[%s0 + $0x30] sm:$0xff]
  %v21 = vld [vmem:[%s0 + $0x38] sm:$0xff]
  %v22 = vld [vmem:[%s0 + $0x40] sm:$0xff]
  %v23 = vld [vmem:[%s0 + $0x48] sm:$0xff]
  %v24 = vld [vmem:[%s0 + $0x50] sm:$0xff]
  %v25 = vld [vmem:[%s0 + $0x58] sm:$0xff]
  %v26 = vld [vmem:[%s0 + $0x60] sm:$0xff]
  %v27 = vld [vmem:[%s0 + $0x68] sm:$0xff]
  %v28 = vld [vmem:[%s0 + $0x70] sm:$0xff]
  %v29 = vld [vmem:[%s0 + $0x78] sm:$0xff]
  %v30 = vld [vmem:[%s0 + $0x80] sm:$0xff]
  %v31 = vld [vmem:[%s0 + $0x88] sm:$0xff]
  %v32 = vld [vmem:[%s0 + $0x90] sm:$0xff]
  %v33 = vld [vmem:[%s0 + $0x98] sm:$0xff]
  %v34 = vld [vmem:[%s0 + $0xa0] sm:$0xff]
  %v35 = vld [vmem:[%s0 + $0xa8] sm:$0xff]
  %v36 = vld [vmem:[%s0 + $0xb0] sm:$0xff]
  %v37 = vld [vmem:[%s0 + $0xb8] sm:$0xff]
  %v38 = vld [vmem:[%s0 + $0xc0] sm:$0xff]
  %v39 = vld [vmem:[%s0 + $0xc8] sm:$0xff]
  %v40 = vld [vmem:[%s0 + $0xd0] sm:$0xff]
  %v41 = vld [vmem:[%s0 + $0xd8] sm:$0xff]
  %v42 = vld [vmem:[%s0 + $0xe0] sm:$0xff]
  %v43 = vld [vmem:[%s0 + $0xe8] sm:$0xff]
  %v44 = vld [vmem:[%s0 + $0xf0] sm:$0xff]
  %v45 = vld [vmem:[%s0 + $0xf8] sm:$0xff]
  %v46 = vld [vmem:[%s1] sm:$0xff]
  %v47 = vld [vmem:[%s1 + $0x8] sm:$0xff]
  %v48 = vld [vmem:[%s1 + $0x10] sm:$0xff]
  %v49 = vld [vmem:[%s1 + $0x18] sm:$0xff]
  %v50 = vld [vmem:[%s1 + $0x20] sm:$0xff]
  %v51 = vld [vmem:[%s1 + $0x28] sm:$0xff]
  %v52 = vld [vmem:[%s2] sm:$0x1]
  %v54 = vperm.slane %v52, 0
  %vm56 = vcmask 392192
  %v58 = vsel %vm56, %v14, 0
  %v61 = vsel %vm56, %v15, 0
  %v64 = vsel %vm56, %v16, 0
  %v67 = vsel %vm56, %v17, 0
  %v70 = vsel %vm56, %v18, 0
  %v73 = vsel %vm56, %v19, 0
  %v76 = vsel %vm56, %v20, 0
  %v79 = vsel %vm56, %v21, 0
  %v82 = vsel %vm56, %v22, 0
  %v85 = vsel %vm56, %v23, 0
  %v88 = vsel %vm56, %v24, 0
  %v91 = vsel %vm56, %v25, 0
  %v94 = vsel %vm56, %v26, 0
  %v97 = vsel %vm56, %v27, 0
  %v100 = vsel %vm56, %v28, 0
  %v103 = vsel %vm56, %v29, 0
  %v106 = vsel %vm56, %v30, 0
  %v109 = vsel %vm56, %v31, 0
  %v112 = vsel %vm56, %v32, 0
  %v115 = vsel %vm56, %v33, 0
  %v118 = vsel %vm56, %v34, 0
  %v121 = vsel %vm56, %v35, 0
  %v124 = vsel %vm56, %v36, 0
  %v127 = vsel %vm56, %v37, 0
  %v130 = vsel %vm56, %v38, 0
  %v133 = vsel %vm56, %v39, 0
  %v136 = vsel %vm56, %v40, 0
  %v139 = vsel %vm56, %v41, 0
  %v142 = vsel %vm56, %v42, 0
  %v145 = vsel %vm56, %v43, 0
  %v148 = vsel %vm56, %v44, 0
  %v151 = vsel %vm56, %v45, 0
  %153 = vmatpush.msra.mxu0 0.0
  %154 = vmatpush.msra.mxu0 0.0
  %155 = vmatpush.msra.mxu0 0.0
  %156 = vmatpush.msra.mxu0 0.0
  %157 = vmatpush.msra.mxu0 0.0
  %158 = vmatpush.msra.mxu0 0.0
  %159 = vmatpush.msra.mxu0 0.0
  %160 = vmatpush.msra.mxu0 0.0
  %161 = vmatpush.msra.mxu0 0.0
  %162 = vmatpush.msra.mxu0 0.0
  %163 = vmatpush.msra.mxu0 %v51
  %164 = vmatpush.msra.mxu0 %v50
  %165 = vmatpush.msra.mxu0 %v49
  %166 = vmatpush.msra.mxu0 %v48
  %167 = vmatpush.msra.mxu0 %v47
  %168 = vmatpush.msra.mxu0 %v46
  %169 = vmatmul.f32.gmra.mxu0 %v58
  %v170 = vpop.f32.mrf.mxu0
  %v171 = vadd.f32 %v54, %v170
  %172 = vmatmul.f32.gmra.mxu0 %v61
  %v173 = vpop.f32.mrf.mxu0
  %v174 = vadd.f32 %v54, %v173
  %175 = vmatmul.f32.gmra.mxu0 %v64
  %v176 = vpop.f32.mrf.mxu0
  %v177 = vadd.f32 %v54, %v176
  %178 = vmatmul.f32.gmra.mxu0 %v67
  %v179 = vpop.f32.mrf.mxu0
  %v180 = vadd.f32 %v54, %v179
  %181 = vmatmul.f32.gmra.mxu0 %v70
  %v182 = vpop.f32.mrf.mxu0
  %v183 = vadd.f32 %v54, %v182
  %184 = vmatmul.f32.gmra.mxu0 %v73
  %v185 = vpop.f32.mrf.mxu0
  %v186 = vadd.f32 %v54, %v185
  %187 = vmatmul.f32.gmra.mxu0 %v76
  %v188 = vpop.f32.mrf.mxu0
  %v189 = vadd.f32 %v54, %v188
  %190 = vmatmul.f32.gmra.mxu0 %v79
  %v191 = vpop.f32.mrf.mxu0
  %v192 = vadd.f32 %v54, %v191
  %193 = vmatmul.f32.gmra.mxu0 %v82
  %v194 = vpop.f32.mrf.mxu0
  %v195 = vadd.f32 %v54, %v194
  %196 = vmatmul.f32.gmra.mxu0 %v85
  %v197 = vpop.f32.mrf.mxu0
  %v198 = vadd.f32 %v54, %v197
  %199 = vmatmul.f32.gmra.mxu0 %v88
  %v200 = vpop.f32.mrf.mxu0
  %v201 = vadd.f32 %v54, %v200
  %202 = vmatmul.f32.gmra.mxu0 %v91
  %v203 = vpop.f32.mrf.mxu0
  %v204 = vadd.f32 %v54, %v203
  %205 = vmatmul.f32.gmra.mxu0 %v94
  %v206 = vpop.f32.mrf.mxu0
  %v207 = vadd.f32 %v54, %v206
  %208 = vmatmul.f32.gmra.mxu0 %v97
  %v209 = vpop.f32.mrf.mxu0
  %v210 = vadd.f32 %v54, %v209
  %211 = vmatmul.f32.gmra.mxu0 %v100
  %v212 = vpop.f32.mrf.mxu0
  %v213 = vadd.f32 %v54, %v212
  %214 = vmatmul.f32.gmra.mxu0 %v103
  %v215 = vpop.f32.mrf.mxu0
  %v216 = vadd.f32 %v54, %v215
  %217 = vmatmul.f32.gmra.mxu0 %v106
  %v218 = vpop.f32.mrf.mxu0
  %v219 = vadd.f32 %v54, %v218
  %220 = vmatmul.f32.gmra.mxu0 %v109
  %v221 = vpop.f32.mrf.mxu0
  %v222 = vadd.f32 %v54, %v221
  %223 = vmatmul.f32.gmra.mxu0 %v112
  %v224 = vpop.f32.mrf.mxu0
  %v225 = vadd.f32 %v54, %v224
  %226 = vmatmul.f32.gmra.mxu0 %v115
  %v227 = vpop.f32.mrf.mxu0
  %v228 = vadd.f32 %v54, %v227
  %229 = vmatmul.f32.gmra.mxu0 %v118
  %v230 = vpop.f32.mrf.mxu0
  %v231 = vadd.f32 %v54, %v230
  %232 = vmatmul.f32.gmra.mxu0 %v121
  %v233 = vpop.f32.mrf.mxu0
  %v234 = vadd.f32 %v54, %v233
  %235 = vmatmul.f32.gmra.mxu0 %v124
  %v236 = vpop.f32.mrf.mxu0
  %v237 = vadd.f32 %v54, %v236
  %238 = vmatmul.f32.gmra.mxu0 %v127
  %v239 = vpop.f32.mrf.mxu0
  %v240 = vadd.f32 %v54, %v239
  %241 = vmatmul.f32.gmra.mxu0 %v130
  %v242 = vpop.f32.mrf.mxu0
  %v243 = vadd.f32 %v54, %v242
  %244 = vmatmul.f32.gmra.mxu0 %v133
  %v245 = vpop.f32.mrf.mxu0
  %v246 = vadd.f32 %v54, %v245
  %247 = vmatmul.f32.gmra.mxu0 %v136
  %v248 = vpop.f32.mrf.mxu0
  %v249 = vadd.f32 %v54, %v248
  %250 = vmatmul.f32.gmra.mxu0 %v139
  %v251 = vpop.f32.mrf.mxu0
  %v252 = vadd.f32 %v54, %v251
  %253 = vmatmul.f32.gmra.mxu0 %v142
  %v254 = vpop.f32.mrf.mxu0
  %v255 = vadd.f32 %v54, %v254
  %256 = vmatmul.f32.gmra.mxu0 %v145
  %v257 = vpop.f32.mrf.mxu0
  %v258 = vadd.f32 %v54, %v257
  %259 = vmatmul.f32.gmra.mxu0 %v148
  %v260 = vpop.f32.mrf.mxu0
  %v261 = vadd.f32 %v54, %v260
  %262 = vmatmul.f32.gmra.mxu0 %v151
  %v263 = vpop.f32.mrf.mxu0
  %v264 = vadd.f32 %v54, %v263
  %265 = vdwg.mxu0
  %v266 = vmax.f32 %v171, 0.0
  %v267 = vmax.f32 %v174, 0.0
  %v268 = vmax.f32 %v177, 0.0
  %v269 = vmax.f32 %v180, 0.0
  %v270 = vmax.f32 %v183, 0.0
  %v271 = vmax.f32 %v186, 0.0
  %v272 = vmax.f32 %v189, 0.0
  %v273 = vmax.f32 %v192, 0.0
  %v274 = vmax.f32 %v195, 0.0
  %v275 = vmax.f32 %v198, 0.0
  %v276 = vmax.f32 %v201, 0.0
  %v277 = vmax.f32 %v204, 0.0
  %v278 = vmax.f32 %v207, 0.0
  %v279 = vmax.f32 %v210, 0.0
  %v280 = vmax.f32 %v213, 0.0
  %v281 = vmax.f32 %v216, 0.0
  %v282 = vmax.f32 %v219, 0.0
  %v283 = vmax.f32 %v222, 0.0
  %v284 = vmax.f32 %v225, 0.0
  %v285 = vmax.f32 %v228, 0.0
  %v286 = vmax.f32 %v231, 0.0
  %v287 = vmax.f32 %v234, 0.0
  %v288 = vmax.f32 %v237, 0.0
  %v289 = vmax.f32 %v240, 0.0
  %v290 = vmax.f32 %v243, 0.0
  %v291 = vmax.f32 %v246, 0.0
  %v292 = vmax.f32 %v249, 0.0
  %v293 = vmax.f32 %v252, 0.0
  %v294 = vmax.f32 %v255, 0.0
  %v295 = vmax.f32 %v258, 0.0
  %v296 = vmax.f32 %v261, 0.0
  %v297 = vmax.f32 %v264, 0.0
  %298 = vst [vmem:[%s3] sm:$0xff] %v266
  %299 = vst [vmem:[%s3 + $0x8] sm:$0xff] %v267
  %300 = vst [vmem:[%s3 + $0x10] sm:$0xff] %v268
  %301 = vst [vmem:[%s3 + $0x18] sm:$0xff] %v269
  %302 = vst [vmem:[%s3 + $0x20] sm:$0xff] %v270
  %303 = vst [vmem:[%s3 + $0x28] sm:$0xff] %v271
  %304 = vst [vmem:[%s3 + $0x30] sm:$0xff] %v272
  %305 = vst [vmem:[%s3 + $0x38] sm:$0xff] %v273
  %306 = vst [vmem:[%s3 + $0x40] sm:$0xff] %v274
  %307 = vst [vmem:[%s3 + $0x48] sm:$0xff] %v275
  %308 = vst [vmem:[%s3 + $0x50] sm:$0xff] %v276
  %309 = vst [vmem:[%s3 + $0x58] sm:$0xff] %v277
  %310 = vst [vmem:[%s3 + $0x60] sm:$0xff] %v278
  %311 = vst [vmem:[%s3 + $0x68] sm:$0xff] %v279
  %312 = vst [vmem:[%s3 + $0x70] sm:$0xff] %v280
  %313 = vst [vmem:[%s3 + $0x78] sm:$0xff] %v281
  %314 = vst [vmem:[%s3 + $0x80] sm:$0xff] %v282
  %315 = vst [vmem:[%s3 + $0x88] sm:$0xff] %v283
  %316 = vst [vmem:[%s3 + $0x90] sm:$0xff] %v284
  %317 = vst [vmem:[%s3 + $0x98] sm:$0xff] %v285
  %318 = vst [vmem:[%s3 + $0xa0] sm:$0xff] %v286
  %319 = vst [vmem:[%s3 + $0xa8] sm:$0xff] %v287
  %320 = vst [vmem:[%s3 + $0xb0] sm:$0xff] %v288
  %321 = vst [vmem:[%s3 + $0xb8] sm:$0xff] %v289
  %322 = vst [vmem:[%s3 + $0xc0] sm:$0xff] %v290
  %323 = vst [vmem:[%s3 + $0xc8] sm:$0xff] %v291
  %324 = vst [vmem:[%s3 + $0xd0] sm:$0xff] %v292
  %325 = vst [vmem:[%s3 + $0xd8] sm:$0xff] %v293
  %326 = vst [vmem:[%s3 + $0xe0] sm:$0xff] %v294
  %327 = vst [vmem:[%s3 + $0xe8] sm:$0xff] %v295
  %328 = vst [vmem:[%s3 + $0xf0] sm:$0xff] %v296
  %329 = vst [vmem:[%s3 + $0xf8] sm:$0xff] %v297
  // Predicated region
  $region14: #{matmul_bias.1} parent=0 // pred_check
    _
  $region15: #{matmul_bias.1} parent=0 // pred_check_branch
    %331 = sbr.rel (0) target = $region17
  $region16: #{matmul_bias.1} parent=0 // pred_region
    _
  $region17: #{matmul_bias.1} parent=0 // pred_fallthru
    _
  // Predicated region
  $region18: #{matmul_bias.1} parent=0 // pred_check
    _
  $region19: #{matmul_bias.1} parent=0 // pred_check_branch
    %333 = sbr.rel (0) target = $region21
  $region20: #{matmul_bias.1} parent=0 // pred_region
    _
  $region21: #{matmul_bias.1} parent=0 // pred_fallthru
    _

</llo_original>
